<compile_context>
chip_gen: v6e
topology: v6e:2x2x1
jax: 0.10.0
libtpu: 0.0.40
codegen_flags: <defaults>
</compile_context>

<pallas_src>
import numpy as np

import jax
import jax.numpy as jnp
from jax.experimental import pallas as pl
from jax.experimental.pallas import tpu as pltpu

LN_EPS = 1e-5  # torch.nn.LayerNorm default eps
LANE = 128


def pair(t):
    return t if isinstance(t, tuple) else (t, t)


# ---------------------------------------------------------------------------
# In-kernel math helpers (traced inside Pallas kernels)
# ---------------------------------------------------------------------------
def _layernorm(x, gamma, beta):
    mean = jnp.mean(x, axis=-1, keepdims=True)
    var = jnp.mean(jnp.square(x - mean), axis=-1, keepdims=True)
    return (x - mean) * jax.lax.rsqrt(var + LN_EPS) * gamma + beta


def _gelu(x):
    # tanh-form GELU: tanh goes to the EUP (separate bundle slot), keeping the
    # VALU free during the FFN.  Max abs deviation from torch's exact-erf GELU
    # is ~1e-3, well inside the test tolerance.
    c = 0.7978845608028654  # sqrt(2/pi)
    return 0.5 * x * (1.0 + jnp.tanh(c * (x + 0.044715 * x * x * x)))


# ---------------------------------------------------------------------------
# Pallas kernels
# ---------------------------------------------------------------------------
def patch_embed_kernel(patches_ref, ln1_g_ref, ln1_b_ref, w_ref, b_ref,
                       ln2_g_ref, ln2_b_ref, cls_ref, pos_ref, out_ref):
    # patches_ref: (1, n, patch_dim); out_ref: (1, n+1, dim)
    p = patches_ref[0]
    y = _layernorm(p, ln1_g_ref[...], ln1_b_ref[...]).astype(jnp.bfloat16)
    y = jnp.dot(y, w_ref[...], preferred_element_type=jnp.float32) + b_ref[...]
    y = _layernorm(y, ln2_g_ref[...], ln2_b_ref[...])
    # Two direct slice stores (no in-kernel concatenate copy).
    out_ref[0, 0:1, :] = cls_ref[...] + pos_ref[0:1, :]
    out_ref[0, 1:, :] = y + pos_ref[1:, :]


def mixer_stack_kernel(x_ref, lnA_g_ref, lnA_b_ref, cDsD_ref, cNnsN_ref,
                       lnF_g_ref, lnF_b_ref, w1_ref, b1_ref, w2_ref, b2_ref,
                       out_ref):
    # grid = (batch, depth); out_ref block index is constant along depth, so
    # the activation stays resident in VMEM for the whole layer stack.
    @pl.when(pl.program_id(1) == 0)
    def _():
        out_ref[...] = x_ref[...]

    x = out_ref[0]                                        # (N, dim) f32
    D = x.shape[-1]

    # --- PreNorm + FNetBlock: Re(2D FFT) as two fused bf16 DFT matmuls ---
    y = _layernorm(x, lnA_g_ref[0], lnA_b_ref[0]).astype(jnp.bfloat16)
    t = jnp.dot(y, cDsD_ref[...], preferred_element_type=jnp.float32)  # (N, 2D)
    t2 = jnp.concatenate([t[:, :D], t[:, D:]], axis=0).astype(jnp.bfloat16)
    mix = jnp.dot(cNnsN_ref[...], t2, preferred_element_type=jnp.float32)
    x = x + mix                                            # residual add

    # --- PreNorm + FeedForward (Linear -> GELU -> Linear), residual add ---
    z = _layernorm(x, lnF_g_ref[0], lnF_b_ref[0]).astype(jnp.bfloat16)
    h = jnp.dot(z, w1_ref[0], preferred_element_type=jnp.float32) + b1_ref[0]
    h = _gelu(h).astype(jnp.bfloat16)
    ff = jnp.dot(h, w2_ref[0], preferred_element_type=jnp.float32) + b2_ref[0]
    out_ref[0] = x + ff


def head_kernel(x_ref, ln_g_ref, ln_b_ref, w_ref, b_ref, out_ref):
    # x_ref: (b, dim) cls features; out_ref: (b, nc_pad) lane-dense logits.
    y = _layernorm(x_ref[...], ln_g_ref[...], ln_b_ref[...]).astype(jnp.bfloat16)
    out_ref[...] = (jnp.dot(y, w_ref[...], preferred_element_type=jnp.float32)
                    + b_ref[...])


# ---------------------------------------------------------------------------
# Wrappers (pallas_call plumbing)
# ---------------------------------------------------------------------------
_VMEM_LIMIT = 32 * 1024 * 1024  # raise v5e's 16 MiB default, safe on v6e/v7x


def _fs1(shape):
    # full-array block for parameters, grid=(b,)
    return pl.BlockSpec(shape, lambda i, s=len(shape): (0,) * s)


def patch_embed(patches, e):
    b, n, pd = patches.shape
    dim = e["w"].shape[1]
    np1 = e["pos"].shape[0]
    return pl.pallas_call(
        patch_embed_kernel,
        out_shape=jax.ShapeDtypeStruct((b, np1, dim), jnp.float32),
        grid=(b,),
        in_specs=[
            pl.BlockSpec((1, n, pd), lambda i: (i, 0, 0)),
            _fs1((1, pd)), _fs1((1, pd)),
            _fs1((pd, dim)), _fs1((1, dim)),
            _fs1((1, dim)), _fs1((1, dim)),
            _fs1((1, dim)), _fs1((np1, dim)),
        ],
        out_specs=pl.BlockSpec((1, np1, dim), lambda i: (i, 0, 0)),
        compiler_params=pltpu.CompilerParams(
            dimension_semantics=("parallel",),
            vmem_limit_bytes=_VMEM_LIMIT),
    )(patches, e["ln1_g"], e["ln1_b"], e["w"], e["b"],
      e["ln2_g"], e["ln2_b"], e["cls"], e["pos"])


def mixer_stack(x, stk, cDsD, cNnsN):
    """All `depth` token-mixer layers in a single pallas_call."""
    b, N, dim = x.shape
    depth, _, mlp = stk["w1"].shape

    def inv(shape):   # grid-invariant (DFT matrices): fetched once
        return pl.BlockSpec(shape, lambda i, l, s=len(shape): (0,) * s)

    def per_layer(shape):  # stacked per-layer weights, indexed by depth coord
        return pl.BlockSpec(shape,
                            lambda i, l, s=len(shape): (l,) + (0,) * (s - 1))

    return pl.pallas_call(
        mixer_stack_kernel,
        out_shape=jax.ShapeDtypeStruct((b, N, dim), jnp.float32),
        grid=(b, depth),
        in_specs=[
            pl.BlockSpec((1, N, dim), lambda i, l: (i, 0, 0)),   # x (read @ l=0)
            per_layer((1, 1, dim)), per_layer((1, 1, dim)),      # lnA g/b
            inv((dim, 2 * dim)), inv((N, 2 * N)),                # fused DFT mats
            per_layer((1, 1, dim)), per_layer((1, 1, dim)),      # lnF g/b
            per_layer((1, dim, mlp)), per_layer((1, 1, mlp)),    # w1, b1
            per_layer((1, mlp, dim)), per_layer((1, 1, dim)),    # w2, b2
        ],
        out_specs=pl.BlockSpec((1, N, dim), lambda i, l: (i, 0, 0)),
        compiler_params=pltpu.CompilerParams(
            dimension_semantics=("parallel", "arbitrary"),
            vmem_limit_bytes=_VMEM_LIMIT),
    )(x, stk["lnA_g"], stk["lnA_b"], cDsD, cNnsN,
      stk["lnF_g"], stk["lnF_b"], stk["w1"], stk["b1"], stk["w2"], stk["b2"])


def head(x_cls, hp):
    b, _ = x_cls.shape
    nc_pad = hp["w"].shape[1]
    return pl.pallas_call(
        head_kernel,
        out_shape=jax.ShapeDtypeStruct((b, nc_pad), jnp.float32),
    )(x_cls, hp["ln_g"], hp["ln_b"], hp["w"], hp["b"])


# ---------------------------------------------------------------------------
# Plain-JAX / host glue
# ---------------------------------------------------------------------------
def to_patches(img, ph, pw):
    # einops: 'b c (h p1) (w p2) -> b (h w) (p1 p2 c)'
    b, c, H, W = img.shape
    h, w = H // ph, W // pw
    x = img.reshape(b, c, h, ph, w, pw)
    x = x.transpose(0, 2, 4, 3, 5, 1)          # b h w p1 p2 c
    return x.reshape(b, h * w, ph * pw * c)


def fused_dft_mats(N, dim):
    """Host-precomputed fused DFT matrices (bf16 for the MXU).

    int64 on the host avoids the int32 i*j overflow for large N/dim.
    """
    def cs(L):
        idx = np.arange(L, dtype=np.int64)
        prod = np.mod(np.outer(idx, idx), L).astype(np.float64)
        ang = (2.0 * np.pi / L) * prod
        return np.cos(ang), np.sin(ang)

    cN, sN = cs(N)
    cD, sD = cs(dim)
    cDsD = jnp.asarray(np.concatenate([cD, sD], axis=1), dtype=jnp.bfloat16)
    cNnsN = jnp.asarray(np.concatenate([cN, -sN], axis=1), dtype=jnp.bfloat16)
    return cDsD, cNnsN


def init_params(key, *, image_size, patch_size, channels, dim, depth, mlp_dim,
                num_classes):
    ih, iw = pair(image_size)
    ph, pw = pair(patch_size)
    num_patches = (ih // ph) * (iw // pw)
    patch_dim = channels * ph * pw
    nc_pad = ((num_classes + LANE - 1) // LANE) * LANE
    keys = iter(jax.random.split(key, 16))

    def nrm(shape, scale=0.02, dtype=jnp.float32):
        v = scale * jax.random.normal(next(keys), shape, dtype=jnp.float32)
        return v.astype(dtype)

    ones = lambda s: jnp.ones(s, jnp.float32)
    zeros = lambda s: jnp.zeros(s, jnp.float32)

    params = {
        "embed": {
            "ln1_g": ones((1, patch_dim)), "ln1_b": zeros((1, patch_dim)),
            "w": nrm((patch_dim, dim), dtype=jnp.bfloat16), "b": nrm((1, dim)),
            "ln2_g": ones((1, dim)), "ln2_b": zeros((1, dim)),
            "cls": nrm((1, dim), 1.0),                      # torch.randn
            "pos": nrm((num_patches + 1, dim), 1.0),        # torch.randn
        },
        "layers": {   # per-layer weights stacked on a leading depth axis
            "lnA_g": ones((depth, 1, dim)), "lnA_b": zeros((depth, 1, dim)),
            "lnF_g": ones((depth, 1, dim)), "lnF_b": zeros((depth, 1, dim)),
            "w1": nrm((depth, dim, mlp_dim), dtype=jnp.bfloat16),
            "b1": nrm((depth, 1, mlp_dim)),
            "w2": nrm((depth, mlp_dim, dim), dtype=jnp.bfloat16),
            "b2": nrm((depth, 1, dim)),
        },
    }
    # Head weights, zero-padded to a lane-dense class axis.
    w_head = jnp.zeros((dim, nc_pad), jnp.bfloat16).at[:, :num_classes].set(
        nrm((dim, num_classes), dtype=jnp.bfloat16))
    b_head = jnp.zeros((1, nc_pad), jnp.float32).at[:, :num_classes].set(
        nrm((1, num_classes)))
    params["head"] = {"ln_g": ones((1, dim)), "ln_b": zeros((1, dim)),
                      "w": w_head, "b": b_head}
    return params


def fnet_forward(img, params, cfg):
    ph, pw = pair(cfg["patch_size"])
    patches = to_patches(img, ph, pw)
    x = patch_embed(patches, params["embed"])            # (b, n+1, dim)
    _, N, dim = x.shape
    cDsD, cNnsN = fused_dft_mats(N, dim)                 # host trace-time consts
    x = mixer_stack(x, params["layers"], cDsD, cNnsN)    # all layers, one call
    x_cls = x[:, 0]                                      # pool == 'cls'
    logits = head(x_cls, params["head"])                 # (b, nc_pad)
    return logits[:, :cfg["num_classes"]]


# ---------------------------------------------------------------------------
# Pure-JAX f32 reference (mirrors the PyTorch forward) for correctness check
# ---------------------------------------------------------------------------
def reference_forward(img, params, cfg):
    f32 = lambda a: a.astype(jnp.float32)

    def ln(x, g, b):
        m = jnp.mean(x, -1, keepdims=True)
        v = jnp.mean(jnp.square(x - m), -1, keepdims=True)
        return (x - m) / jnp.sqrt(v + LN_EPS) * g + b

    ph, pw = pair(cfg["patch_size"])
    patches = to_patches(img, ph, pw)
    e = params["embed"]
    x = ln(patches, e["ln1_g"][0], e["ln1_b"][0])
    x = x @ f32(e["w"]) + e["b"][0]
    x = ln(x, e["ln2_g"][0], e["ln2_b"][0])
    b = x.shape[0]
    cls = jnp.broadcast_to(e["cls"][None], (b, 1, x.shape[-1]))
    x = jnp.concatenate([cls, x], axis=1) + e["pos"][None]
    L = params["layers"]
    for l in range(L["w1"].shape[0]):
        y = ln(x, L["lnA_g"][l, 0], L["lnA_b"][l, 0])
        f = jnp.real(jnp.fft.fft(jnp.fft.fft(y, axis=-1), axis=-2))
        x = x + f
        z = ln(x, L["lnF_g"][l, 0], L["lnF_b"][l, 0])
        h = jax.nn.gelu(z @ f32(L["w1"][l]) + L["b1"][l, 0], approximate=False)
        x = x + (h @ f32(L["w2"][l]) + L["b2"][l, 0])
    hp = params["head"]
    xc = x[:, 0]
    logits = ln(xc, hp["ln_g"][0], hp["ln_b"][0]) @ f32(hp["w"]) + hp["b"][0]
    return logits[:, :cfg["num_classes"]]


if __name__ == "__main__":
    cfg = dict(image_size=16, patch_size=4, channels=3, dim=128, depth=2,
               mlp_dim=256, num_classes=10)
    key = jax.random.PRNGKey(0)
    k_img, k_par = jax.random.split(key)
    img = jax.random.normal(k_img, (2, cfg["channels"], 16, 16),
                            dtype=jnp.float32)
    params = init_params(k_par, **cfg)

    out = fnet_forward(img, params, cfg)
    out = jax.block_until_ready(out)
    assert out.shape == (2, cfg["num_classes"])

    ref = reference_forward(img, params, cfg)
    assert jnp.allclose(out, ref, rtol=2e-2, atol=2e-2), (out, ref)

    print("KERNEL_OK")
</pallas_src>

<mosaic_0001>
module attributes {stable_mosaic.version = 11 : i64} {
  func.func @patch_embed_kernel(%arg0: i32, %arg1: memref<1x16x48xf32, #tpu.memory_space<vmem>>, %arg2: memref<1x48xf32, #tpu.memory_space<vmem>>, %arg3: memref<1x48xf32, #tpu.memory_space<vmem>>, %arg4: memref<48x128xbf16, #tpu.memory_space<vmem>>, %arg5: memref<1x128xf32, #tpu.memory_space<vmem>>, %arg6: memref<1x128xf32, #tpu.memory_space<vmem>>, %arg7: memref<1x128xf32, #tpu.memory_space<vmem>>, %arg8: memref<1x128xf32, #tpu.memory_space<vmem>>, %arg9: memref<17x128xf32, #tpu.memory_space<vmem>>, %arg10: memref<1x17x128xf32, #tpu.memory_space<vmem>>) attributes {dimension_semantics = [#tpu.dimension_semantics<parallel>], iteration_bounds = array<i64: 2>, scalar_prefetch = 0 : i64, scratch_operands = 0 : i64, tpu.core_type = #tpu.core_type<tc>, window_params = [{transform_indices = @transform_0, window_bounds = array<i64: 1, 16, 48>}, {pipeline_mode = #tpu.pipeline_mode<synchronous>, transform_indices = @transform_1, window_bounds = array<i64: 1, 48>}, {pipeline_mode = #tpu.pipeline_mode<synchronous>, transform_indices = @transform_2, window_bounds = array<i64: 1, 48>}, {pipeline_mode = #tpu.pipeline_mode<synchronous>, transform_indices = @transform_3, window_bounds = array<i64: 48, 128>}, {pipeline_mode = #tpu.pipeline_mode<synchronous>, transform_indices = @transform_4, window_bounds = array<i64: 1, 128>}, {pipeline_mode = #tpu.pipeline_mode<synchronous>, transform_indices = @transform_5, window_bounds = array<i64: 1, 128>}, {pipeline_mode = #tpu.pipeline_mode<synchronous>, transform_indices = @transform_6, window_bounds = array<i64: 1, 128>}, {pipeline_mode = #tpu.pipeline_mode<synchronous>, transform_indices = @transform_7, window_bounds = array<i64: 1, 128>}, {pipeline_mode = #tpu.pipeline_mode<synchronous>, transform_indices = @transform_8, window_bounds = array<i64: 17, 128>}, {transform_indices = @transform_9, window_bounds = array<i64: 1, 17, 128>}]} {
    %c0 = arith.constant 0 : index
    %c0_0 = arith.constant 0 : index
    %c0_1 = arith.constant 0 : index
    %0 = vector.load %arg1[%c0, %c0_0, %c0_1] : memref<1x16x48xf32, #tpu.memory_space<vmem>>, vector<1x16x48xf32>
    %1 = vector.shape_cast %0 : vector<1x16x48xf32> to vector<16x48xf32>
    %c0_2 = arith.constant 0 : index
    %c0_3 = arith.constant 0 : index
    %2 = vector.load %arg2[%c0_2, %c0_3] : memref<1x48xf32, #tpu.memory_space<vmem>>, vector<1x48xf32>
    %c0_4 = arith.constant 0 : index
    %c0_5 = arith.constant 0 : index
    %3 = vector.load %arg3[%c0_4, %c0_5] : memref<1x48xf32, #tpu.memory_space<vmem>>, vector<1x48xf32>
    %cst = arith.constant dense<0.000000e+00> : vector<16xf32>
    %4 = vector.multi_reduction <add>, %1, %cst [1] : vector<16x48xf32> to vector<16xf32>
    %5 = vector.shape_cast %4 : vector<16xf32> to vector<16x1xf32>
    %cst_6 = arith.constant 4.800000e+01 : f32
    %6 = vector.broadcast %cst_6 : f32 to vector<16x1xf32>
    %7 = arith.divf %5, %6 : vector<16x1xf32>
    %8 = vector.broadcast %7 : vector<16x1xf32> to vector<16x48xf32>
    %9 = arith.subf %1, %8 : vector<16x48xf32>
    %10 = arith.mulf %9, %9 : vector<16x48xf32>
    %cst_7 = arith.constant dense<0.000000e+00> : vector<16xf32>
    %11 = vector.multi_reduction <add>, %10, %cst_7 [1] : vector<16x48xf32> to vector<16xf32>
    %12 = vector.shape_cast %11 : vector<16xf32> to vector<16x1xf32>
    %cst_8 = arith.constant 4.800000e+01 : f32
    %13 = vector.broadcast %cst_8 : f32 to vector<16x1xf32>
    %14 = arith.divf %12, %13 : vector<16x1xf32>
    %15 = vector.broadcast %7 : vector<16x1xf32> to vector<16x48xf32>
    %16 = arith.subf %1, %15 : vector<16x48xf32>
    %cst_9 = arith.constant 9.99999974E-6 : f32
    %17 = vector.broadcast %cst_9 : f32 to vector<16x1xf32>
    %18 = arith.addf %14, %17 : vector<16x1xf32>
    %19 = math.rsqrt %18 : vector<16x1xf32>
    %20 = vector.broadcast %19 : vector<16x1xf32> to vector<16x48xf32>
    %21 = arith.mulf %16, %20 : vector<16x48xf32>
    %22 = vector.broadcast %2 : vector<1x48xf32> to vector<16x48xf32>
    %23 = arith.mulf %21, %22 : vector<16x48xf32>
    %24 = vector.broadcast %3 : vector<1x48xf32> to vector<16x48xf32>
    %25 = arith.addf %23, %24 : vector<16x48xf32>
    %26 = arith.truncf %25 : vector<16x48xf32> to vector<16x48xbf16>
    %c0_10 = arith.constant 0 : index
    %c0_11 = arith.constant 0 : index
    %27 = vector.load %arg4[%c0_10, %c0_11] : memref<48x128xbf16, #tpu.memory_space<vmem>>, vector<48x128xbf16>
    %cst_12 = arith.constant dense<0.000000e+00> : vector<16x128xf32>
    %28 = tpu.matmul %26, %27, %cst_12 {dimension_numbers = #tpu.dot_dimension_numbers<[1], [0], [0], [1], [0, 0, 1, 1], [], []>} : vector<16x48xbf16>, vector<48x128xbf16>, vector<16x128xf32> -> vector<16x128xf32>
    %c0_13 = arith.constant 0 : index
    %c0_14 = arith.constant 0 : index
    %29 = vector.load %arg5[%c0_13, %c0_14] : memref<1x128xf32, #tpu.memory_space<vmem>>, vector<1x128xf32>
    %30 = vector.broadcast %29 : vector<1x128xf32> to vector<16x128xf32>
    %31 = arith.addf %28, %30 : vector<16x128xf32>
    %c0_15 = arith.constant 0 : index
    %c0_16 = arith.constant 0 : index
    %32 = vector.load %arg6[%c0_15, %c0_16] : memref<1x128xf32, #tpu.memory_space<vmem>>, vector<1x128xf32>
    %c0_17 = arith.constant 0 : index
    %c0_18 = arith.constant 0 : index
    %33 = vector.load %arg7[%c0_17, %c0_18] : memref<1x128xf32, #tpu.memory_space<vmem>>, vector<1x128xf32>
    %cst_19 = arith.constant dense<0.000000e+00> : vector<16xf32>
    %34 = vector.multi_reduction <add>, %31, %cst_19 [1] : vector<16x128xf32> to vector<16xf32>
    %35 = vector.shape_cast %34 : vector<16xf32> to vector<16x1xf32>
    %cst_20 = arith.constant 1.280000e+02 : f32
    %36 = vector.broadcast %cst_20 : f32 to vector<16x1xf32>
    %37 = arith.divf %35, %36 : vector<16x1xf32>
    %38 = vector.broadcast %37 : vector<16x1xf32> to vector<16x128xf32>
    %39 = arith.subf %31, %38 : vector<16x128xf32>
    %40 = arith.mulf %39, %39 : vector<16x128xf32>
    %cst_21 = arith.constant dense<0.000000e+00> : vector<16xf32>
    %41 = vector.multi_reduction <add>, %40, %cst_21 [1] : vector<16x128xf32> to vector<16xf32>
    %42 = vector.shape_cast %41 : vector<16xf32> to vector<16x1xf32>
    %cst_22 = arith.constant 1.280000e+02 : f32
    %43 = vector.broadcast %cst_22 : f32 to vector<16x1xf32>
    %44 = arith.divf %42, %43 : vector<16x1xf32>
    %45 = vector.broadcast %37 : vector<16x1xf32> to vector<16x128xf32>
    %46 = arith.subf %31, %45 : vector<16x128xf32>
    %cst_23 = arith.constant 9.99999974E-6 : f32
    %47 = vector.broadcast %cst_23 : f32 to vector<16x1xf32>
    %48 = arith.addf %44, %47 : vector<16x1xf32>
    %49 = math.rsqrt %48 : vector<16x1xf32>
    %50 = vector.broadcast %49 : vector<16x1xf32> to vector<16x128xf32>
    %51 = arith.mulf %46, %50 : vector<16x128xf32>
    %52 = vector.broadcast %32 : vector<1x128xf32> to vector<16x128xf32>
    %53 = arith.mulf %51, %52 : vector<16x128xf32>
    %54 = vector.broadcast %33 : vector<1x128xf32> to vector<16x128xf32>
    %55 = arith.addf %53, %54 : vector<16x128xf32>
    %c0_24 = arith.constant 0 : index
    %c0_25 = arith.constant 0 : index
    %56 = vector.load %arg8[%c0_24, %c0_25] : memref<1x128xf32, #tpu.memory_space<vmem>>, vector<1x128xf32>
    %c0_26 = arith.constant 0 : index
    %c0_27 = arith.constant 0 : index
    %57 = vector.load %arg9[%c0_26, %c0_27] : memref<17x128xf32, #tpu.memory_space<vmem>>, vector<1x128xf32>
    %58 = arith.addf %56, %57 : vector<1x128xf32>
    %c0_28 = arith.constant 0 : index
    %c0_29 = arith.constant 0 : index
    %c0_30 = arith.constant 0 : index
    %59 = vector.load %arg10[%c0_28, %c0_29, %c0_30] : memref<1x17x128xf32, #tpu.memory_space<vmem>>, vector<1x1x128xf32>
    %60 = vector.shape_cast %59 : vector<1x1x128xf32> to vector<1x128xf32>
    %61 = vector.shape_cast %58 : vector<1x128xf32> to vector<1x1x128xf32>
    tpu.vector_store %arg10[%c0_28, %c0_29, %c0_30], %61 {strides = array<i32>} : memref<1x17x128xf32, #tpu.memory_space<vmem>>, vector<1x1x128xf32>,
    %c1 = arith.constant 1 : index
    %c0_31 = arith.constant 0 : index
    %62 = vector.load %arg9[%c1, %c0_31] : memref<17x128xf32, #tpu.memory_space<vmem>>, vector<16x128xf32>
    %63 = arith.addf %55, %62 : vector<16x128xf32>
    %c0_32 = arith.constant 0 : index
    %c1_33 = arith.constant 1 : index
    %c0_34 = arith.constant 0 : index
    %64 = vector.load %arg10[%c0_32, %c1_33, %c0_34] : memref<1x17x128xf32, #tpu.memory_space<vmem>>, vector<1x16x128xf32>
    %65 = vector.shape_cast %64 : vector<1x16x128xf32> to vector<16x128xf32>
    %66 = vector.shape_cast %63 : vector<16x128xf32> to vector<1x16x128xf32>
    tpu.vector_store %arg10[%c0_32, %c1_33, %c0_34], %66 {strides = array<i32>} : memref<1x17x128xf32, #tpu.memory_space<vmem>>, vector<1x16x128xf32>,
    return
  }
  func.func @transform_0(%arg0: i32) -> (i32, i32, i32) {
    %c0_i32 = arith.constant 0 : i32
    %c0_i32_0 = arith.constant 0 : i32
    %c0_i32_1 = arith.constant 0 : i32
    return %arg0, %c0_i32, %c0_i32_0 : i32, i32, i32
  }
  func.func @transform_1(%arg0: i32) -> (i32, i32) {
    %c0_i32 = arith.constant 0 : i32
    %c0_i32_0 = arith.constant 0 : i32
    %c0_i32_1 = arith.constant 0 : i32
    return %c0_i32, %c0_i32_0 : i32, i32
  }
  func.func @transform_2(%arg0: i32) -> (i32, i32) {
    %c0_i32 = arith.constant 0 : i32
    %c0_i32_0 = arith.constant 0 : i32
    %c0_i32_1 = arith.constant 0 : i32
    return %c0_i32, %c0_i32_0 : i32, i32
  }
  func.func @transform_3(%arg0: i32) -> (i32, i32) {
    %c0_i32 = arith.constant 0 : i32
    %c0_i32_0 = arith.constant 0 : i32
    %c0_i32_1 = arith.constant 0 : i32
    return %c0_i32, %c0_i32_0 : i32, i32
  }
  func.func @transform_4(%arg0: i32) -> (i32, i32) {
    %c0_i32 = arith.constant 0 : i32
    %c0_i32_0 = arith.constant 0 : i32
    %c0_i32_1 = arith.constant 0 : i32
    return %c0_i32, %c0_i32_0 : i32, i32
  }
  func.func @transform_5(%arg0: i32) -> (i32, i32) {
    %c0_i32 = arith.constant 0 : i32
    %c0_i32_0 = arith.constant 0 : i32
    %c0_i32_1 = arith.constant 0 : i32
    return %c0_i32, %c0_i32_0 : i32, i32
  }
  func.func @transform_6(%arg0: i32) -> (i32, i32) {
    %c0_i32 = arith.constant 0 : i32
    %c0_i32_0 = arith.constant 0 : i32
    %c0_i32_1 = arith.constant 0 : i32
    return %c0_i32, %c0_i32_0 : i32, i32
  }
  func.func @transform_7(%arg0: i32) -> (i32, i32) {
    %c0_i32 = arith.constant 0 : i32
    %c0_i32_0 = arith.constant 0 : i32
    %c0_i32_1 = arith.constant 0 : i32
    return %c0_i32, %c0_i32_0 : i32, i32
  }
  func.func @transform_8(%arg0: i32) -> (i32, i32) {
    %c0_i32 = arith.constant 0 : i32
    %c0_i32_0 = arith.constant 0 : i32
    %c0_i32_1 = arith.constant 0 : i32
    return %c0_i32, %c0_i32_0 : i32, i32
  }
  func.func @transform_9(%arg0: i32) -> (i32, i32, i32) {
    %c0_i32 = arith.constant 0 : i32
    %c0_i32_0 = arith.constant 0 : i32
    %c0_i32_1 = arith.constant 0 : i32
    return %arg0, %c0_i32, %c0_i32_0 : i32, i32, i32
  }
}

</mosaic_0001>

<llo_original>
// kernel: tpu_custom_call.1
$region0: #{tpu_custom_call.1}
  #allocation0 [shape = 'u32[]', space=smem, size = 0x4, offset = 0x4, fixed_abs, tag = 'smem constant byte address 0x4 - core index']
  #allocation1 [shape = 'u32[144,128]{1,0:T(1,128)}', space=vmem, size = 0x12000, scoped, tag = 'internal scratch']
  %s0 = inlined_call_operand.hbm [shape: f32[2,16,48], index: 0, kind: input, shape index: {}]
  %s1 = inlined_call_operand.vmem [shape: f32[1,48], index: 1, kind: input, shape index: {}]
  %s2 = inlined_call_operand.vmem [shape: f32[1,48], index: 2, kind: input, shape index: {}]
  %s3 = inlined_call_operand.hbm [shape: bf16[48,128], index: 3, kind: input, shape index: {}]
  %s4 = inlined_call_operand.vmem [shape: f32[1,128], index: 4, kind: input, shape index: {}]
  %s5 = inlined_call_operand.vmem [shape: f32[1,128], index: 5, kind: input, shape index: {}]
  %s6 = inlined_call_operand.vmem [shape: f32[1,128], index: 6, kind: input, shape index: {}]
  %s7 = inlined_call_operand.vmem [shape: f32[1,128], index: 7, kind: input, shape index: {}]
  %s8 = inlined_call_operand.hbm [shape: f32[17,128], index: 8, kind: input, shape index: {}]
  %s9 = inlined_call_operand.vmem [shape: f32[2,17,128], index: 9, kind: output, shape index: {}]
  %s10 = sld [smem:[#allocation0]]
  $region81: #{tpu_custom_call.1} parent=0
    _
  %s12 = ssub.s32 1, %s10
  %s13 = scalar_select 0, %s12, %s10
  $region1: #{tpu_custom_call.1} parent=0
    #allocation2 [shape = 'u8[16384]{0}', space=vmem, size = 0x4000, scoped, tag = 'input window, operand 0']
    #allocation3 [shape = 's32[2]{0}', space=sflag, size = 0x8, scoped, tag = 'scoped memory for tpu_custom_call.1']
    #allocation4 [shape = 'u8[12288]{0}', space=vmem, size = 0x3000, scoped, tag = 'input window, operand 3, single buffered']
    #allocation5 [shape = 's32[1]{0}', space=sflag, size = 0x4, scoped, tag = 'scoped memory for tpu_custom_call.1']
    #allocation6 [shape = 'u8[12288]{0}', space=vmem, size = 0x3000, scoped, tag = 'input window, operand 8, single buffered']
    %14 = vsyncpa [#allocation3], 0
    %s15 = scalar_lea.sflag [#allocation3], 1
    %16 = vsyncpa %s15, 0
    %17 = vsyncpa [#allocation5], 0
    loop: start=0, step=1, limit=4
    $region2: #{tpu_custom_call.1} parent=1 // loop_pre_header
      _
    $region3: #{tpu_custom_call.1} parent=1 // loop_header
      %s19 = sphi 0, %s23
      %p20 = scmp.ge.s32.totalorder %s19, 4
      %s29 = sphi 0, %s31
      %s32 = sphi 0, %s29
      %s33 = sphi 0, %s32
      %s49 = sphi 0, %s33
      %s53 = sphi 0, %s53
      %s55 = sphi 0, %s53
      %s56 = sphi 0, %s55
      %s70 = sphi 0, %s56
      %s74 = sphi 0, %s74
      %s76 = sphi 0, %s74
      %s77 = sphi 0, %s76
      %s91 = sphi 0, %s77
      %s95 = sphi 0, %s95
      %s97 = sphi 0, %s95
      %s98 = sphi 0, %s97
      %s112 = sphi 0, %s98
      %s116 = sphi 0, %s116
      %s118 = sphi 0, %s116
      %s119 = sphi 0, %s118
      %s133 = sphi 0, %s119
      %s137 = sphi 0, %s137
      %s139 = sphi 0, %s137
      %s140 = sphi 0, %s139
      %s154 = sphi 0, %s140
      %s158 = sphi 0, %s158
      %s160 = sphi 0, %s158
      %s161 = sphi 0, %s160
      %s175 = sphi 0, %s161
      %s179 = sphi 0, %s179
      %s181 = sphi 0, %s179
      %s182 = sphi 0, %s181
      %s196 = sphi 0, %s182
      %s200 = sphi 0, %s200
      %s202 = sphi 0, %s200
      %s203 = sphi 0, %s202
      %s217 = sphi 0, %s203
      %s223 = sphi 0, %s225
      %s226 = sphi 0, %s223
      %s227 = sphi 0, %s226
      %s243 = sphi 0, %s227
    $region4: #{tpu_custom_call.1} parent=1 // loop_header_branch
      %22 = sbr.rel (%p20) target = $region8
    $region5: #{tpu_custom_call.1} parent=1 // loop_body
      %s24 = ssub.s32 %s19, 1
      %s25 = ssub.s32 %s19, 2
      %s26 = sadd.s32 %s19, 1
      %s27 = ssub.s32 %s19, %s26
      %p28 = scmp.eq.s32.totalorder %s27, 0
      %s30 = sadd.s32 %s29, 1
      %s31 = scalar_select %p28, %s29, %s30
      %p34 = pneg %p28
      %p35 = scmp.eq.s32.totalorder %s19, 1
      %p36 = por %p34, %p35
      %p37 = scmp.ne.s32.totalorder %s29, %s32
      %p38 = scmp.eq.s32.totalorder %s19, 0
      %p39 = por %p37, %p38
      %p40 = scmp.ne.s32.totalorder %s29, %s32
      %p41 = scmp.eq.s32.totalorder %s24, 1
      %p42 = por %p40, %p41
      %p43 = scmp.ne.s32.totalorder %s32, %s33
      %p44 = scmp.eq.s32.totalorder %s24, 0
      %p45 = por %p43, %p44
      %p46 = scmp.ne.s32.totalorder %s32, %s33
      %p47 = scmp.eq.s32.totalorder %s25, 1
      %p48 = por %p46, %p47
      %p50 = scmp.ne.s32.totalorder %s33, %s49
      %p51 = scmp.eq.s32.totalorder %s25, 0
      %p52 = por %p50, %p51
      %s54 = sadd.s32 %s53, 1
      %p57 = scmp.eq.s32.totalorder %s19, 1
      %p58 = scmp.ne.s32.totalorder %s53, %s55
      %p59 = scmp.eq.s32.totalorder %s19, 0
      %p60 = por %p58, %p59
      %p61 = scmp.ne.s32.totalorder %s53, %s55
      %p62 = scmp.eq.s32.totalorder %s24, 1
      %p63 = por %p61, %p62
      %p64 = scmp.ne.s32.totalorder %s55, %s56
      %p65 = scmp.eq.s32.totalorder %s24, 0
      %p66 = por %p64, %p65
      %p67 = scmp.ne.s32.totalorder %s55, %s56
      %p68 = scmp.eq.s32.totalorder %s25, 1
      %p69 = por %p67, %p68
      %p71 = scmp.ne.s32.totalorder %s56, %s70
      %p72 = scmp.eq.s32.totalorder %s25, 0
      %p73 = por %p71, %p72
      %s75 = sadd.s32 %s74, 1
      %p78 = scmp.eq.s32.totalorder %s19, 1
      %p79 = scmp.ne.s32.totalorder %s74, %s76
      %p80 = scmp.eq.s32.totalorder %s19, 0
      %p81 = por %p79, %p80
      %p82 = scmp.ne.s32.totalorder %s74, %s76
      %p83 = scmp.eq.s32.totalorder %s24, 1
      %p84 = por %p82, %p83
      %p85 = scmp.ne.s32.totalorder %s76, %s77
      %p86 = scmp.eq.s32.totalorder %s24, 0
      %p87 = por %p85, %p86
      %p88 = scmp.ne.s32.totalorder %s76, %s77
      %p89 = scmp.eq.s32.totalorder %s25, 1
      %p90 = por %p88, %p89
      %p92 = scmp.ne.s32.totalorder %s77, %s91
      %p93 = scmp.eq.s32.totalorder %s25, 0
      %p94 = por %p92, %p93
      %s96 = sadd.s32 %s95, 1
      %p99 = scmp.eq.s32.totalorder %s19, 1
      %p100 = scmp.ne.s32.totalorder %s95, %s97
      %p101 = scmp.eq.s32.totalorder %s19, 0
      %p102 = por %p100, %p101
      %p103 = scmp.ne.s32.totalorder %s95, %s97
      %p104 = scmp.eq.s32.totalorder %s24, 1
      %p105 = por %p103, %p104
      %p106 = scmp.ne.s32.totalorder %s97, %s98
      %p107 = scmp.eq.s32.totalorder %s24, 0
      %p108 = por %p106, %p107
      %p109 = scmp.ne.s32.totalorder %s97, %s98
      %p110 = scmp.eq.s32.totalorder %s25, 1
      %p111 = por %p109, %p110
      %p113 = scmp.ne.s32.totalorder %s98, %s112
      %p114 = scmp.eq.s32.totalorder %s25, 0
      %p115 = por %p113, %p114
      %s117 = sadd.s32 %s116, 1
      %p120 = scmp.eq.s32.totalorder %s19, 1
      %p121 = scmp.ne.s32.totalorder %s116, %s118
      %p122 = scmp.eq.s32.totalorder %s19, 0
      %p123 = por %p121, %p122
      %p124 = scmp.ne.s32.totalorder %s116, %s118
      %p125 = scmp.eq.s32.totalorder %s24, 1
      %p126 = por %p124, %p125
      %p127 = scmp.ne.s32.totalorder %s118, %s119
      %p128 = scmp.eq.s32.totalorder %s24, 0
      %p129 = por %p127, %p128
      %p130 = scmp.ne.s32.totalorder %s118, %s119
      %p131 = scmp.eq.s32.totalorder %s25, 1
      %p132 = por %p130, %p131
      %p134 = scmp.ne.s32.totalorder %s119, %s133
      %p135 = scmp.eq.s32.totalorder %s25, 0
      %p136 = por %p134, %p135
      %s138 = sadd.s32 %s137, 1
      %p141 = scmp.eq.s32.totalorder %s19, 1
      %p142 = scmp.ne.s32.totalorder %s137, %s139
      %p143 = scmp.eq.s32.totalorder %s19, 0
      %p144 = por %p142, %p143
      %p145 = scmp.ne.s32.totalorder %s137, %s139
      %p146 = scmp.eq.s32.totalorder %s24, 1
      %p147 = por %p145, %p146
      %p148 = scmp.ne.s32.totalorder %s139, %s140
      %p149 = scmp.eq.s32.totalorder %s24, 0
      %p150 = por %p148, %p149
      %p151 = scmp.ne.s32.totalorder %s139, %s140
      %p152 = scmp.eq.s32.totalorder %s25, 1
      %p153 = por %p151, %p152
      %p155 = scmp.ne.s32.totalorder %s140, %s154
      %p156 = scmp.eq.s32.totalorder %s25, 0
      %p157 = por %p155, %p156
      %s159 = sadd.s32 %s158, 1
      %p162 = scmp.eq.s32.totalorder %s19, 1
      %p163 = scmp.ne.s32.totalorder %s158, %s160
      %p164 = scmp.eq.s32.totalorder %s19, 0
      %p165 = por %p163, %p164
      %p166 = scmp.ne.s32.totalorder %s158, %s160
      %p167 = scmp.eq.s32.totalorder %s24, 1
      %p168 = por %p166, %p167
      %p169 = scmp.ne.s32.totalorder %s160, %s161
      %p170 = scmp.eq.s32.totalorder %s24, 0
      %p171 = por %p169, %p170
      %p172 = scmp.ne.s32.totalorder %s160, %s161
      %p173 = scmp.eq.s32.totalorder %s25, 1
      %p174 = por %p172, %p173
      %p176 = scmp.ne.s32.totalorder %s161, %s175
      %p177 = scmp.eq.s32.totalorder %s25, 0
      %p178 = por %p176, %p177
      %s180 = sadd.s32 %s179, 1
      %p183 = scmp.eq.s32.totalorder %s19, 1
      %p184 = scmp.ne.s32.totalorder %s179, %s181
      %p185 = scmp.eq.s32.totalorder %s19, 0
      %p186 = por %p184, %p185
      %p187 = scmp.ne.s32.totalorder %s179, %s181
      %p188 = scmp.eq.s32.totalorder %s24, 1
      %p189 = por %p187, %p188
      %p190 = scmp.ne.s32.totalorder %s181, %s182
      %p191 = scmp.eq.s32.totalorder %s24, 0
      %p192 = por %p190, %p191
      %p193 = scmp.ne.s32.totalorder %s181, %s182
      %p194 = scmp.eq.s32.totalorder %s25, 1
      %p195 = por %p193, %p194
      %p197 = scmp.ne.s32.totalorder %s182, %s196
      %p198 = scmp.eq.s32.totalorder %s25, 0
      %p199 = por %p197, %p198
      %s201 = sadd.s32 %s200, 1
      %p204 = scmp.eq.s32.totalorder %s19, 1
      %p205 = scmp.ne.s32.totalorder %s200, %s202
      %p206 = scmp.eq.s32.totalorder %s19, 0
      %p207 = por %p205, %p206
      %p208 = scmp.ne.s32.totalorder %s200, %s202
      %p209 = scmp.eq.s32.totalorder %s24, 1
      %p210 = por %p208, %p209
      %p211 = scmp.ne.s32.totalorder %s202, %s203
      %p212 = scmp.eq.s32.totalorder %s24, 0
      %p213 = por %p211, %p212
      %p214 = scmp.ne.s32.totalorder %s202, %s203
      %p215 = scmp.eq.s32.totalorder %s25, 1
      %p216 = por %p214, %p215
      %p218 = scmp.ne.s32.totalorder %s203, %s217
      %p219 = scmp.eq.s32.totalorder %s25, 0
      %p220 = por %p218, %p219
      %s221 = ssub.s32 %s19, %s26
      %p222 = scmp.eq.s32.totalorder %s221, 0
      %s224 = sadd.s32 %s223, 1
      %s225 = scalar_select %p222, %s223, %s224
      %p228 = pneg %p222
      %p229 = scmp.eq.s32.totalorder %s19, 1
      %p230 = por %p228, %p229
      %p231 = scmp.ne.s32.totalorder %s223, %s226
      %p232 = scmp.eq.s32.totalorder %s19, 0
      %p233 = por %p231, %p232
      %p234 = scmp.ne.s32.totalorder %s223, %s226
      %p235 = scmp.eq.s32.totalorder %s24, 1
      %p236 = por %p234, %p235
      %p237 = scmp.ne.s32.totalorder %s226, %s227
      %p238 = scmp.eq.s32.totalorder %s24, 0
      %p239 = por %p237, %p238
      %p240 = scmp.ne.s32.totalorder %s226, %s227
      %p241 = scmp.eq.s32.totalorder %s25, 1
      %p242 = por %p240, %p241
      %p244 = scmp.ne.s32.totalorder %s227, %s243
      %p245 = scmp.eq.s32.totalorder %s25, 0
      %p246 = por %p244, %p245
      %p247 = scmp.le.s32.totalorder 1, %s19
      %p248 = scmp.lt.s32.totalorder %s19, 3
      %p249 = pnand %p247, %p248
      %p250 = pneg %p249
      // Predicated region
      $region9: #{tpu_custom_call.1} parent=5 // pred_check
        _
      $region10: #{tpu_custom_call.1} parent=5 // pred_check_branch
        %252 = sbr.rel (%p249) target = $region12
      $region11: #{tpu_custom_call.1} parent=5 // pred_region
        %s253 = ssub.s32 %s19, 1
        // Predicated region
        $region13: #{tpu_custom_call.1} parent=11 // pred_check
          %p254 = pneg %p66
        $region14: #{tpu_custom_call.1} parent=11 // pred_check_branch
          %256 = sbr.rel (%p254) target = $region16
        $region15: #{tpu_custom_call.1} parent=11 // pred_region
          _
        $region16: #{tpu_custom_call.1} parent=11 // pred_fallthru
          _
        // Predicated region
        $region17: #{tpu_custom_call.1} parent=11 // pred_check
          %p257 = pneg %p87
        $region18: #{tpu_custom_call.1} parent=11 // pred_check_branch
          %259 = sbr.rel (%p257) target = $region20
        $region19: #{tpu_custom_call.1} parent=11 // pred_region
          _
        $region20: #{tpu_custom_call.1} parent=11 // pred_fallthru
          _
        // Predicated region
        $region21: #{tpu_custom_call.1} parent=11 // pred_check
          %p260 = pneg %p108
        $region22: #{tpu_custom_call.1} parent=11 // pred_check_branch
          %262 = sbr.rel (%p260) target = $region24
        $region23: #{tpu_custom_call.1} parent=11 // pred_region
          %s264 = ssub.s32 384, 384
          %265 = vsyncadd [#allocation5], %s264
          %s266 = sshll.u32 [#allocation4], 4
          %s267 = int_to_ptr.vmem [resolvable:$true] %s266
          %272 = dma.hbm_to_vmem [thread:$0]  %s3, 384, %s267, [#allocation5], 64, 64, 4
        $region24: #{tpu_custom_call.1} parent=11 // pred_fallthru
          _
        // Predicated region
        $region25: #{tpu_custom_call.1} parent=11 // pred_check
          %p273 = pneg %p129
        $region26: #{tpu_custom_call.1} parent=11 // pred_check_branch
          %275 = sbr.rel (%p273) target = $region28
        $region27: #{tpu_custom_call.1} parent=11 // pred_region
          _
        $region28: #{tpu_custom_call.1} parent=11 // pred_fallthru
          _
        // Predicated region
        $region29: #{tpu_custom_call.1} parent=11 // pred_check
          %p276 = pneg %p150
        $region30: #{tpu_custom_call.1} parent=11 // pred_check_branch
          %278 = sbr.rel (%p276) target = $region32
        $region31: #{tpu_custom_call.1} parent=11 // pred_region
          _
        $region32: #{tpu_custom_call.1} parent=11 // pred_fallthru
          _
        // Predicated region
        $region33: #{tpu_custom_call.1} parent=11 // pred_check
          %p279 = pneg %p171
        $region34: #{tpu_custom_call.1} parent=11 // pred_check_branch
          %281 = sbr.rel (%p279) target = $region36
        $region35: #{tpu_custom_call.1} parent=11 // pred_region
          _
        $region36: #{tpu_custom_call.1} parent=11 // pred_fallthru
          _
        // Predicated region
        $region37: #{tpu_custom_call.1} parent=11 // pred_check
          %p282 = pneg %p192
        $region38: #{tpu_custom_call.1} parent=11 // pred_check_branch
          %284 = sbr.rel (%p282) target = $region40
        $region39: #{tpu_custom_call.1} parent=11 // pred_region
          _
        $region40: #{tpu_custom_call.1} parent=11 // pred_fallthru
          _
        // Predicated region
        $region41: #{tpu_custom_call.1} parent=11 // pred_check
          %p285 = pneg %p213
        $region42: #{tpu_custom_call.1} parent=11 // pred_check_branch
          %287 = sbr.rel (%p285) target = $region44
        $region43: #{tpu_custom_call.1} parent=11 // pred_region
          %s289 = ssub.s32 384, 384
          %290 = vsyncadd [#allocation5], %s289
          %s291 = sshll.u32 [#allocation6], 4
          %s292 = int_to_ptr.vmem [resolvable:$true] %s291
          %297 = dma.hbm_to_vmem [thread:$0]  %s8, 384, %s292, [#allocation5], 128, 128, 8
        $region44: #{tpu_custom_call.1} parent=11 // pred_fallthru
          _
      $region12: #{tpu_custom_call.1} parent=5 // pred_fallthru
        _
      %p298 = scmp.lt.s32.totalorder %s19, 2
      // Predicated region
      $region45: #{tpu_custom_call.1} parent=5 // pred_check
        %p299 = pneg %p298
      $region46: #{tpu_custom_call.1} parent=5 // pred_check_branch
        %301 = sbr.rel (%p299) target = $region48
      $region47: #{tpu_custom_call.1} parent=5 // pred_region
        // Predicated region
        $region49: #{tpu_custom_call.1} parent=47 // pred_check
          %p302 = pneg %p39
        $region50: #{tpu_custom_call.1} parent=47 // pred_check_branch
          %304 = sbr.rel (%p302) target = $region52
        $region51: #{tpu_custom_call.1} parent=47 // pred_region
          %s305 = sand.u32 %s29, 1
          %s306 = scalar_lea.sflag [#allocation3], %s305
          %s307 = sand.u32 %s29, 1
          %s308 = smul.addr %s307, 16
          %s309 = scalar_lea.vmem [#allocation2], %s308
          %s311 = ssub.s32 256, 256
          %312 = vsyncadd %s306, %s311
          %s313 = smul.addr %s19, 2
          %s314 = smul.addr %s313, 128
          %s315 = scalar_lea.hbm %s0, %s314
          %s316 = sshll.u32 %s309, 4
          %s317 = int_to_ptr.vmem [resolvable:$true] %s316
          %322 = dma.hbm_to_vmem [thread:$0]  %s315, 256, %s317, %s306, 128, 128, 8
        $region52: #{tpu_custom_call.1} parent=47 // pred_fallthru
          _
      $region48: #{tpu_custom_call.1} parent=5 // pred_fallthru
        _
      %p323 = scmp.le.s32.totalorder 1, %s19
      %p324 = scmp.lt.s32.totalorder %s19, 3
      %p325 = pnand %p323, %p324
      %p326 = pneg %p325
      // Predicated region
      $region53: #{tpu_custom_call.1} parent=5 // pred_check
        _
      $region54: #{tpu_custom_call.1} parent=5 // pred_check_branch
        %328 = sbr.rel (%p325) target = $region56
      $region55: #{tpu_custom_call.1} parent=5 // pred_region
        %s329 = ssub.s32 %s19, 1
        %s330 = sand.u32 %s32, 1
        %s331 = scalar_lea.sflag [#allocation3], %s330
        %s332 = sand.u32 %s32, 1
        %s333 = smul.addr %s332, 16
        %s334 = scalar_lea.vmem [#allocation2], %s333
        // Predicated region
        $region57: #{tpu_custom_call.1} parent=55 // pred_check
          %p335 = pneg %p45
        $region58: #{tpu_custom_call.1} parent=55 // pred_check_branch
          %337 = sbr.rel (%p335) target = $region60
        $region59: #{tpu_custom_call.1} parent=55 // pred_region
          %338 = dma.done %s331, 256
        $region60: #{tpu_custom_call.1} parent=55 // pred_fallthru
          _
        // Predicated region
        $region61: #{tpu_custom_call.1} parent=55 // pred_check
          %p339 = pneg %p108
        $region62: #{tpu_custom_call.1} parent=55 // pred_check_branch
          %341 = sbr.rel (%p339) target = $region64
        $region63: #{tpu_custom_call.1} parent=55 // pred_region
          %342 = dma.done [#allocation5], 384
        $region64: #{tpu_custom_call.1} parent=55 // pred_fallthru
          _
        // Predicated region
        $region65: #{tpu_custom_call.1} parent=55 // pred_check
          %p343 = pneg %p213
        $region66: #{tpu_custom_call.1} parent=55 // pred_check_branch
          %345 = sbr.rel (%p343) target = $region68
        $region67: #{tpu_custom_call.1} parent=55 // pred_region
          %346 = dma.done [#allocation5], 384
        $region68: #{tpu_custom_call.1} parent=55 // pred_fallthru
          _
        %s347 = sand.u32 %s32, 1
        %s348 = scalar_lea.sflag [#allocation3], %s347
        %s349 = sand.u32 %s32, 1
        %s350 = smul.addr %s349, 16
        %s351 = scalar_lea.vmem [#allocation2], %s350
        %p352 = pneg %p45
        %p353 = pneg %p42
        %p354 = pneg %p66
        %p355 = pneg %p63
        %p356 = pneg %p87
        %p357 = pneg %p84
        %p358 = pneg %p108
        %p359 = pneg %p105
        %p360 = pneg %p129
        %p361 = pneg %p126
        %p362 = pneg %p150
        %p363 = pneg %p147
        %p364 = pneg %p171
        %p365 = pneg %p168
        %p366 = pneg %p192
        %p367 = pneg %p189
        %p368 = pneg %p213
        %p369 = pneg %p210
        %p370 = pneg %p239
        %p371 = pneg %p236
        %p372 = scmp.lt.s32.totalorder %s24, 1
        %s373 = scalar_select %p372, %s24, 1
        %s374 = smul.addr %s373, 3
        %s375 = smul.addr %s374, 8
        %s376 = scalar_lea.vmem %s9, %s375
        %p377 = scmp.lt.s32.totalorder %s24, 1
        %s378 = scalar_select %p377, %s24, 1
        %s379 = smul.addr %s378, 3
        %s380 = smul.addr %s379, 8
        %s381 = scalar_lea.vmem %s9, %s380
        %v383 = vld [vmem:[%s334] sm:$0xff]
        %v384 = vld [vmem:[%s334 + $0x8] sm:$0xff]
        %v385 = vld [vmem:[%s1] sm:$0x1]
        %v386 = vld [vmem:[%s2] sm:$0x1]
        %vm387 = vcmask 392192
        %v388 = vsel %vm387, %v383, 0.0
        %389 = vadd.xlane.f32.xlu0 %v388
        %v390 = vpop.xlane.xlu0 %389
        %v391 = vsel %vm387, %v384, 0.0
        %392 = vadd.xlane.f32.xlu0 %v391
        %v393 = vpop.xlane.xlu0 %392
        %v394 = vrcp.pop 48.0
        %v395 = vmul.f32 %v390, %v394
        %v396 = vmul.f32 %v393, %v394
        %v397 = vsub.f32 %v383, %v395
        %v398 = vsub.f32 %v384, %v396
        %v399 = vmul.f32 %v397, %v397
        %v400 = vmul.f32 %v398, %v398
        %v401 = vsel %vm387, %v399, 0.0
        %402 = vadd.xlane.f32.xlu0 %v401
        %v403 = vpop.xlane.xlu0 %402
        %v404 = vsel %vm387, %v400, 0.0
        %405 = vadd.xlane.f32.xlu0 %v404
        %v406 = vpop.xlane.xlu0 %405
        %v407 = vmul.f32 %v403, %v394
        %v408 = vmul.f32 %v406, %v394
        %v409 = vadd.f32 %v407, 1e-05
        %v410 = vadd.f32 %v408, 1e-05
        %v411 = vrsqrt.pop %v409
        %v412 = vrsqrt.pop %v410
        %v413 = vmul.f32 %v397, %v411
        %v414 = vmul.f32 %v398, %v412
        %v416 = vlaneseq
        %v417 = vshrl.u32 %v416, 7
        %v418 = vsub.s32 0, %v417
        %v419 = vrot.slane %v385, %v418
        %v421 = vmul.f32 %v413, %v419
        %v422 = vmul.f32 %v414, %v419
        %v424 = vlaneseq
        %v425 = vshrl.u32 %v424, 7
        %v426 = vsub.s32 0, %v425
        %v427 = vrot.slane %v386, %v426
        %v429 = vadd.f32 %v421, %v427
        %v430 = vadd.f32 %v422, %v427
        %v431 = vpack.c.bf16 %v430, %v429
        %v432 = vld [vmem:[#allocation4] sm:$0xf]
        %v433 = vld [vmem:[#allocation4 + $0x4] sm:$0xf]
        %v434 = vld [vmem:[#allocation4 + $0x8] sm:$0xf]
        %v435 = vld [vmem:[#allocation4 + $0xc] sm:$0xf]
        %v436 = vld [vmem:[#allocation4 + $0x10] sm:$0xf]
        %v437 = vld [vmem:[#allocation4 + $0x14] sm:$0xf]
        %v438 = vld [vmem:[%s4] sm:$0x1]
        %v440 = vlaneseq
        %v441 = vshrl.u32 %v440, 7
        %v442 = vsub.s32 0, %v441
        %v443 = vrot.slane %v438, %v442
        %v451 = vunpack.c.l.b16 %v432
        %v452 = vunpack.c.l.b16 %v433
        %v453 = vunpack.c.l.b16 %v434
        %v454 = vunpack.c.l.b16 %v435
        %v455 = vunpack.c.l.b16 %v436
        %v456 = vunpack.c.l.b16 %v437
        %v457 = vpack.c.b16 %v452, %v451
        %v458 = vpack.c.b16 %v454, %v453
        %v459 = vpack.c.b16 %v456, %v455
        %v464 = vsel %vm387, %v431, 0
        %466 = vmatprep.subr.bf16.mxu0 0
        %467 = vmatpush1.bf16.msra.mxu0 0
        %468 = vmatprep.subr.bf16.mxu0 0
        %469 = vmatpush1.bf16.msra.mxu0 0
        %470 = vmatprep.subr.bf16.mxu0 0
        %471 = vmatpush1.bf16.msra.mxu0 0
        %472 = vmatprep.subr.bf16.mxu0 0
        %473 = vmatpush1.bf16.msra.mxu0 0
        %474 = vmatprep.subr.bf16.mxu0 0
        %475 = vmatpush1.bf16.msra.mxu0 0
        %476 = vmatprep.subr.bf16.mxu0 0
        %477 = vmatpush1.bf16.msra.mxu0 %v459
        %478 = vmatprep.subr.bf16.mxu0 0
        %479 = vmatpush1.bf16.msra.mxu0 %v458
        %480 = vmatprep.subr.bf16.mxu0 0
        %481 = vmatpush1.bf16.msra.mxu0 %v457
        %482 = vmatprep.subr.bf16.mxu0 0
        %483 = vmatpush2.bf16.msra.mxu0 0
        %484 = vmatprep.subr.bf16.mxu0 0
        %485 = vmatpush2.bf16.msra.mxu0 0
        %486 = vmatprep.subr.bf16.mxu0 0
        %487 = vmatpush2.bf16.msra.mxu0 0
        %488 = vmatprep.subr.bf16.mxu0 0
        %489 = vmatpush2.bf16.msra.mxu0 0
        %490 = vmatprep.subr.bf16.mxu0 0
        %491 = vmatpush2.bf16.msra.mxu0 0
        %492 = vmatprep.subr.bf16.mxu0 0
        %493 = vmatpush2.bf16.msra.mxu0 0
        %494 = vmatprep.subr.bf16.mxu0 0
        %495 = vmatpush2.bf16.msra.mxu0 0
        %496 = vmatprep.subr.bf16.mxu0 0
        %497 = vmatpush2.bf16.msra.mxu0 0
        %498 = vmatprep.mubr.bf16.mxu0 0
        %499 = vmatmul.mubr.bf16.gmra.mxu0 %v464
        %v500 = vpop.f32.mrf.mxu0
        %v501 = vadd.f32 %v443, %v500
        %v502 = vpop.f32.mrf.mxu0
        %v503 = vpop.f32.mrf.mxu0
        %v504 = vadd.f32 %v443, %v503
        %v505 = vpop.f32.mrf.mxu0
        %506 = vdwg.mxu0
        %v507 = vld [vmem:[%s5] sm:$0x1]
        %v508 = vld [vmem:[%s6] sm:$0x1]
        %509 = vadd.xlane.f32.xlu0 %v501
        %v510 = vpop.xlane.xlu0 %509
        %511 = vadd.xlane.f32.xlu0 %v504
        %v512 = vpop.xlane.xlu0 %511
        %v513 = vrcp.pop 128.0
        %v514 = vmul.f32 %v510, %v513
        %v515 = vmul.f32 %v512, %v513
        %v516 = vsub.f32 %v501, %v514
        %v517 = vsub.f32 %v504, %v515
        %v518 = vmul.f32 %v516, %v516
        %v519 = vmul.f32 %v517, %v517
        %520 = vadd.xlane.f32.xlu0 %v518
        %v521 = vpop.xlane.xlu0 %520
        %522 = vadd.xlane.f32.xlu0 %v519
        %v523 = vpop.xlane.xlu0 %522
        %v524 = vmul.f32 %v521, %v513
        %v525 = vmul.f32 %v523, %v513
        %v526 = vadd.f32 %v524, 1e-05
        %v527 = vadd.f32 %v525, 1e-05
        %v528 = vrsqrt.pop %v526
        %v529 = vrsqrt.pop %v527
        %v530 = vmul.f32 %v516, %v528
        %v531 = vmul.f32 %v517, %v529
        %v533 = vlaneseq
        %v534 = vshrl.u32 %v533, 7
        %v535 = vsub.s32 0, %v534
        %v536 = vrot.slane %v507, %v535
        %v538 = vmul.f32 %v530, %v536
        %v539 = vmul.f32 %v531, %v536
        %v541 = vlaneseq
        %v542 = vshrl.u32 %v541, 7
        %v543 = vsub.s32 0, %v542
        %v544 = vrot.slane %v508, %v543
        %v546 = vadd.f32 %v538, %v544
        %v547 = vadd.f32 %v539, %v544
        %v548 = vld [vmem:[%s7] sm:$0x1]
        %v549 = vld [vmem:[#allocation6] sm:$0x1]
        %v550 = vadd.f32 %v548, %v549
        %551 = vst [vmem:[%s381] sm:$0x1] %v550
        %v552 = vld [vmem:[#allocation6 + $0x1] sm:$0xff]
        %v553 = vld [vmem:[#allocation6 + $0x9] sm:$0xff]
        %v554 = vadd.f32 %v546, %v552
        %v555 = vadd.f32 %v547, %v553
        %556 = vst [vmem:[%s381 + $0x1] sm:$0xff] %v554
        %557 = vst [vmem:[%s381 + $0x9] sm:$0xff] %v555
        %p558 = scmp.lt.s32.totalorder %s24, 1
        %s559 = scalar_select %p558, %s24, 1
        %s560 = smul.addr %s559, 3
        %s561 = smul.addr %s560, 8
        %s562 = scalar_lea.vmem %s9, %s561
        // Predicated region
        $region69: #{tpu_custom_call.1} parent=55 // pred_check
          %p563 = pneg %p236
        $region70: #{tpu_custom_call.1} parent=55 // pred_check_branch
          %565 = sbr.rel (%p563) target = $region72
        $region71: #{tpu_custom_call.1} parent=55 // pred_region
          _
        $region72: #{tpu_custom_call.1} parent=55 // pred_fallthru
          _
      $region56: #{tpu_custom_call.1} parent=5 // pred_fallthru
        _
      %p566 = scmp.le.s32.totalorder 2, %s19
      // Predicated region
      $region73: #{tpu_custom_call.1} parent=5 // pred_check
        %p567 = pneg %p566
      $region74: #{tpu_custom_call.1} parent=5 // pred_check_branch
        %569 = sbr.rel (%p567) target = $region76
      $region75: #{tpu_custom_call.1} parent=5 // pred_region
        %s570 = ssub.s32 %s19, 2
        // Predicated region
        $region77: #{tpu_custom_call.1} parent=75 // pred_check
          %p571 = pneg %p242
        $region78: #{tpu_custom_call.1} parent=75 // pred_check_branch
          %573 = sbr.rel (%p571) target = $region80
        $region79: #{tpu_custom_call.1} parent=75 // pred_region
          %p574 = scmp.lt.s32.totalorder %s25, 1
          %s575 = scalar_select %p574, %s25, 1
          %s576 = smul.addr %s575, 3
          %s577 = smul.addr %s576, 8
          %s578 = scalar_lea.vmem %s9, %s577
        $region80: #{tpu_custom_call.1} parent=75 // pred_fallthru
          _
      $region76: #{tpu_custom_call.1} parent=5 // pred_fallthru
        _
    $region6: #{tpu_custom_call.1} parent=1 // loop_footer
      %s23 = sadd.s32 1, %s19
    $region7: #{tpu_custom_call.1} parent=1 // loop_footer_branch
      %18 = sbr.rel target = $region3
    $region8: #{tpu_custom_call.1} parent=1 // loop_exit
      _
    %579 = vsyncpa [#allocation3], 1
    %s580 = scalar_lea.sflag [#allocation3], 1
    %581 = vsyncpa %s580, 1
    %582 = vsyncpa [#allocation5], 1

</llo_original>
